<compile_context>
chip_gen: v7x
topology: tpu7x:2x2x1
jax: 0.10.0
libtpu: 0.0.40
codegen_flags: <defaults>
</compile_context>

<pallas_src>
import jax
import jax.numpy as jnp
from jax import lax
from jax.experimental import pallas as pl
from jax.experimental.pallas import tpu as pltpu


def encoding_kernel(x_ref, c_ref, c2_ref, s_ref, out_ref):
    # x_ref:   (Bt, D, N)  batch block in native channel-major layout
    # c_ref:   (K, D)      codewords (grid-invariant)
    # c2_ref:  (K, D)      precomputed (-2 * scale_k) * codewords[k]
    # s_ref:   (K, 1)      per-codeword scale
    # out_ref: (Bt, K, D)  aggregated residual encoding
    c = c_ref[...]
    c2 = c2_ref[...]
    s = s_ref[...]
    bt = x_ref.shape[0]

    def body(b, carry):
        x = x_ref[b]                                                  # (D, N), N on lanes

        # xc2[k, n] = -2 * s_k * sum_d c[k, d] * x[d, n]   (MXU, no transpose)
        xc2 = lax.dot_general(c2, x, (((1,), (0,)), ((), ())),
                              preferred_element_type=jnp.float32)     # (K, N)
        xx = jnp.sum(x * x, axis=0, keepdims=True)                    # (1, N)

        # Scaled L2 up to a per-k constant (s_k*||c_k||^2 cancels under softmax over N).
        sl = s * xx + xc2                                             # (K, N)

        # softmax over N (== F.softmax(..., dim=1) on (B, N, K)); exp is lane-dense.
        m = jnp.max(sl, axis=1, keepdims=True)                        # (K, 1)
        p = jnp.exp(sl - m)                                           # (K, N)
        denom = jnp.sum(p, axis=1, keepdims=True)                     # (K, 1)

        # Deferred normalization: contract the UNNORMALIZED p with x on the MXU,
        # then scale the tiny (K, D) result.  sum_n a[k,n] == 1 -> epilogue is "- c".
        pt_x = lax.dot_general(p, x, (((1,), (1,)), ((), ())),
                               preferred_element_type=jnp.float32)    # (K, D)
        out_ref[b] = (pt_x * pl.reciprocal(denom, approx=True) - c).astype(out_ref.dtype)
        return carry

    lax.fori_loop(0, bt, body, None, unroll=True)


def _pick_block_b(B, D, N, target_bytes=1 << 20):
    """Largest divisor of B giving ~target_bytes x-blocks, keeping grid length >= 2."""
    per_b = D * N * 4
    want = max(1, target_bytes // per_b)
    if B >= 2:
        want = min(want, B // 2)   # keep >= 2 grid steps so both v7x TCs get work
    want = max(1, min(want, B))
    bb = 1
    for d in range(1, int(want) + 1):
        if B % d == 0:
            bb = d
    return bb


def encoding_forward(x_nchw, codewords, scale, *, block_b=None):
    """x_nchw: (B, D, H, W); codewords: (K, D); scale: (K,). Returns (B, K, D) float32."""
    B, D, H, W = x_nchw.shape
    K = codewords.shape[0]
    N = H * W

    if block_b is None:
        block_b = _pick_block_b(B, D, N)
    assert B % block_b == 0, "block_b must divide B"

    # Free reshape only -- x kept in native (B, D, N) layout, no HBM transpose.
    x_bdn = x_nchw.reshape(B, D, N).astype(jnp.float32)
    c = codewords.astype(jnp.float32)
    s = scale.reshape(K, 1).astype(jnp.float32)
    c2 = (-2.0 * s) * c                                   # fold -2*scale into codewords

    # VMEM budget: double-buffered x + out blocks plus small grid-invariant params.
    vmem_est = (2 * block_b * D * N * 4
                + 2 * block_b * K * max(D, 128) * 4
                + 4 * K * max(D, 128) * 4
                + (1 << 20))
    cp_kwargs = dict(dimension_semantics=("parallel",))
    if vmem_est > (16 << 20):                             # v5e default scoped limit
        cp_kwargs["vmem_limit_bytes"] = min(int(vmem_est * 1.25), 100 << 20)

    return pl.pallas_call(
        encoding_kernel,
        out_shape=jax.ShapeDtypeStruct((B, K, D), jnp.float32),
        grid_spec=pltpu.PrefetchScalarGridSpec(
            num_scalar_prefetch=0,
            grid=(B // block_b,),
            in_specs=[
                pl.BlockSpec((block_b, D, N), lambda b: (b, 0, 0)),   # x (native layout)
                pl.BlockSpec((K, D), lambda b: (0, 0)),               # codewords
                pl.BlockSpec((K, D), lambda b: (0, 0)),               # -2*scale*codewords
                pl.BlockSpec((K, 1), lambda b: (0, 0)),               # scale
            ],
            out_specs=pl.BlockSpec((block_b, K, D), lambda b: (b, 0, 0)),
        ),
        compiler_params=pltpu.CompilerParams(**cp_kwargs),
    )(x_bdn, c, c2, s)


def encoding_reference(x_nchw, codewords, scale):
    """Pure-JAX reference mirroring the PyTorch forward exactly."""
    B, D, H, W = x_nchw.shape
    x = jnp.transpose(x_nchw.reshape(B, D, H * W), (0, 2, 1))       # (B, N, D)
    diff = x[:, :, None, :] - codewords[None, None, :, :]           # (B, N, K, D)
    sl = scale[None, None, :] * jnp.sum(diff * diff, axis=-1)       # (B, N, K)
    a = jax.nn.softmax(sl, axis=1)                                  # dim=1 as in the module
    e = jnp.sum(a[..., None] * diff, axis=1)                        # (B, K, D)
    return e


if __name__ == "__main__":
    B, D, H, W, K = 2, 32, 16, 16, 16   # N = H*W = 256 -> full 128-lane vregs in-kernel

    key = jax.random.PRNGKey(0)
    k_code, k_scale, k_x = jax.random.split(key, 3)

    # Parameter init matching Encoding.reset_params()
    std1 = 1.0 / (K * D) ** 0.5
    codewords = jax.random.uniform(k_code, (K, D), jnp.float32, -std1, std1)
    scale = jax.random.uniform(k_scale, (K,), jnp.float32, -1.0, 0.0)

    # Input matching the docstring example: uniform(-0.5, 0.5), NCHW
    x = jax.random.uniform(k_x, (B, D, H, W), jnp.float32, -0.5, 0.5)

    out = encoding_forward(x, codewords, scale)
    out = jax.block_until_ready(out)

    ref = encoding_reference(x, codewords, scale)
    assert out.shape == (B, K, D)
    assert jnp.allclose(out, ref, rtol=1e-3, atol=1e-3), "mismatch vs reference"

    print("KERNEL_OK")
</pallas_src>

<mosaic_0001>
module attributes {stable_mosaic.version = 11 : i64} {
  func.func @encoding_kernel(%arg0: i32, %arg1: memref<1x32x256xf32, #tpu.memory_space<vmem>>, %arg2: memref<16x32xf32, #tpu.memory_space<vmem>>, %arg3: memref<16x32xf32, #tpu.memory_space<vmem>>, %arg4: memref<16x1xf32, #tpu.memory_space<vmem>>, %arg5: memref<1x16x32xf32, #tpu.memory_space<vmem>>) attributes {dimension_semantics = [#tpu.dimension_semantics<parallel>], iteration_bounds = array<i64: 2>, scalar_prefetch = 0 : i64, scratch_operands = 0 : i64, tpu.core_type = #tpu.core_type<tc>, window_params = [{transform_indices = @transform_0, window_bounds = array<i64: 1, 32, 256>}, {pipeline_mode = #tpu.pipeline_mode<synchronous>, transform_indices = @transform_1, window_bounds = array<i64: 16, 32>}, {pipeline_mode = #tpu.pipeline_mode<synchronous>, transform_indices = @transform_2, window_bounds = array<i64: 16, 32>}, {pipeline_mode = #tpu.pipeline_mode<synchronous>, transform_indices = @transform_3, window_bounds = array<i64: 16, 1>}, {transform_indices = @transform_4, window_bounds = array<i64: 1, 16, 32>}]} {
    %c0 = arith.constant 0 : index
    %c0_0 = arith.constant 0 : index
    %0 = vector.load %arg2[%c0, %c0_0] : memref<16x32xf32, #tpu.memory_space<vmem>>, vector<16x32xf32>
    %c0_1 = arith.constant 0 : index
    %c0_2 = arith.constant 0 : index
    %1 = vector.load %arg3[%c0_1, %c0_2] : memref<16x32xf32, #tpu.memory_space<vmem>>, vector<16x32xf32>
    %c0_3 = arith.constant 0 : index
    %c0_4 = arith.constant 0 : index
    %2 = vector.load %arg4[%c0_3, %c0_4] : memref<16x1xf32, #tpu.memory_space<vmem>>, vector<16x1xf32>
    %c0_i32 = arith.constant 0 : i32
    %3 = arith.index_cast %c0_i32 : i32 to index
    %c0_5 = arith.constant 0 : index
    %c0_6 = arith.constant 0 : index
    %4 = vector.load %arg1[%3, %c0_5, %c0_6] : memref<1x32x256xf32, #tpu.memory_space<vmem>>, vector<1x32x256xf32>
    %5 = vector.shape_cast %4 : vector<1x32x256xf32> to vector<32x256xf32>
    %cst = arith.constant dense<0.000000e+00> : vector<16x256xf32>
    %6 = tpu.matmul %1, %5, %cst {dimension_numbers = #tpu.dot_dimension_numbers<[1], [0], [0], [1], [0, 0, 1, 1], [], []>} : vector<16x32xf32>, vector<32x256xf32>, vector<16x256xf32> -> vector<16x256xf32>
    %7 = arith.mulf %5, %5 : vector<32x256xf32>
    %cst_7 = arith.constant dense<0.000000e+00> : vector<256xf32>
    %8 = vector.multi_reduction <add>, %7, %cst_7 [0] : vector<32x256xf32> to vector<256xf32>
    %9 = vector.shape_cast %8 : vector<256xf32> to vector<1x256xf32>
    %10 = vector.broadcast %2 : vector<16x1xf32> to vector<16x256xf32>
    %11 = vector.broadcast %9 : vector<1x256xf32> to vector<16x256xf32>
    %12 = arith.mulf %10, %11 : vector<16x256xf32>
    %13 = arith.addf %12, %6 : vector<16x256xf32>
    %cst_8 = arith.constant dense<0xFF800000> : vector<16xf32>
    %14 = vector.multi_reduction <maximumf>, %13, %cst_8 [1] : vector<16x256xf32> to vector<16xf32>
    %15 = vector.shape_cast %14 : vector<16xf32> to vector<16x1xf32>
    %16 = vector.broadcast %15 : vector<16x1xf32> to vector<16x256xf32>
    %17 = arith.subf %13, %16 : vector<16x256xf32>
    %18 = math.exp %17 : vector<16x256xf32>
    %cst_9 = arith.constant dense<0.000000e+00> : vector<16xf32>
    %19 = vector.multi_reduction <add>, %18, %cst_9 [1] : vector<16x256xf32> to vector<16xf32>
    %20 = vector.shape_cast %19 : vector<16xf32> to vector<16x1xf32>
    %cst_10 = arith.constant dense<0.000000e+00> : vector<16x32xf32>
    %21 = tpu.matmul %18, %5, %cst_10 {dimension_numbers = #tpu.dot_dimension_numbers<[1], [1], [0], [0], [0, 0, 1, 0], [], []>} : vector<16x256xf32>, vector<32x256xf32>, vector<16x32xf32> -> vector<16x32xf32>
    %22 = tpu.reciprocal %20 {approx = true} : vector<16x1xf32> -> vector<16x1xf32>
    %23 = vector.broadcast %22 : vector<16x1xf32> to vector<16x32xf32>
    %24 = arith.mulf %21, %23 : vector<16x32xf32>
    %25 = arith.subf %24, %0 : vector<16x32xf32>
    %26 = arith.index_cast %c0_i32 : i32 to index
    %c0_11 = arith.constant 0 : index
    %c0_12 = arith.constant 0 : index
    %27 = vector.load %arg5[%26, %c0_11, %c0_12] : memref<1x16x32xf32, #tpu.memory_space<vmem>>, vector<1x16x32xf32>
    %28 = vector.shape_cast %27 : vector<1x16x32xf32> to vector<16x32xf32>
    %29 = vector.shape_cast %25 : vector<16x32xf32> to vector<1x16x32xf32>
    tpu.vector_store %arg5[%26, %c0_11, %c0_12], %29 {strides = array<i32>} : memref<1x16x32xf32, #tpu.memory_space<vmem>>, vector<1x16x32xf32>,
    %c1_i32 = arith.constant 1 : i32
    return
  }
  func.func @transform_0(%arg0: i32) -> (i32, i32, i32) {
    %c0_i32 = arith.constant 0 : i32
    %c0_i32_0 = arith.constant 0 : i32
    %c0_i32_1 = arith.constant 0 : i32
    return %arg0, %c0_i32, %c0_i32_0 : i32, i32, i32
  }
  func.func @transform_1(%arg0: i32) -> (i32, i32) {
    %c0_i32 = arith.constant 0 : i32
    %c0_i32_0 = arith.constant 0 : i32
    %c0_i32_1 = arith.constant 0 : i32
    return %c0_i32, %c0_i32_0 : i32, i32
  }
  func.func @transform_2(%arg0: i32) -> (i32, i32) {
    %c0_i32 = arith.constant 0 : i32
    %c0_i32_0 = arith.constant 0 : i32
    %c0_i32_1 = arith.constant 0 : i32
    return %c0_i32, %c0_i32_0 : i32, i32
  }
  func.func @transform_3(%arg0: i32) -> (i32, i32) {
    %c0_i32 = arith.constant 0 : i32
    %c0_i32_0 = arith.constant 0 : i32
    %c0_i32_1 = arith.constant 0 : i32
    return %c0_i32, %c0_i32_0 : i32, i32
  }
  func.func @transform_4(%arg0: i32) -> (i32, i32, i32) {
    %c0_i32 = arith.constant 0 : i32
    %c0_i32_0 = arith.constant 0 : i32
    %c0_i32_1 = arith.constant 0 : i32
    return %arg0, %c0_i32, %c0_i32_0 : i32, i32, i32
  }
}

</mosaic_0001>

<llo_original>
// kernel: tpu_custom_call.1
$region0: #{tpu_custom_call.1}
  #allocation0 [shape = 'u32[]', space=smem, size = 0x4, offset = 0x4, fixed_abs, tag = 'smem constant byte address 0x4 - core index']
  #allocation1 [shape = 'u32[144,128]{1,0:T(1,128)}', space=vmem, size = 0x12000, scoped, tag = 'internal scratch']
  %s0 = inlined_call_operand.hbm [shape: f32[2,32,256], index: 0, kind: input, shape index: {}]
  %s1 = inlined_call_operand.vmem [shape: f32[16,32], index: 1, kind: input, shape index: {}]
  %s2 = inlined_call_operand.hbm [shape: f32[16,32], index: 2, kind: input, shape index: {}]
  %s3 = inlined_call_operand.vmem [shape: f32[16,1], index: 3, kind: input, shape index: {}]
  %s4 = inlined_call_operand.hbm [shape: f32[2,16,32], index: 4, kind: output, shape index: {}]
  %s5 = sld [smem:[#allocation0]]
  $region57: #{tpu_custom_call.1} parent=0
    _
  %s7 = ssub.s32 1, %s5
  %s8 = scalar_select 0, %s7, %s5
  $region1: #{tpu_custom_call.1} parent=0
    #allocation2 [shape = 'u8[65536]{0}', space=vmem, size = 0x10000, scoped, tag = 'input window, operand 0']
    #allocation3 [shape = 's32[2]{0}', space=sflag, size = 0x8, scoped, tag = 'scoped memory for tpu_custom_call.1']
    #allocation4 [shape = 's32[2]{0}', space=sflag, size = 0x8, scoped, tag = 'scoped memory for tpu_custom_call.1']
    #allocation5 [shape = 'u8[8192]{0}', space=vmem, size = 0x2000, scoped, tag = 'input window, operand 2, single buffered']
    #allocation6 [shape = 's32[1]{0}', space=sflag, size = 0x4, scoped, tag = 'scoped memory for tpu_custom_call.1']
    #allocation7 [shape = 'u8[16384]{0}', space=vmem, size = 0x4000, scoped, tag = 'output window, operand 0']
    %9 = vsyncpa [#allocation3], 0
    %s10 = scalar_lea.sflag [#allocation3], 1
    %11 = vsyncpa %s10, 0
    %12 = vsyncpa [#allocation6], 0
    %13 = vsyncpa [#allocation4], 0
    %s14 = scalar_lea.sflag [#allocation4], 1
    %15 = vsyncpa %s14, 0
    loop: start=0, step=1, limit=4
    $region2: #{tpu_custom_call.1} parent=1 // loop_pre_header
      _
    $region3: #{tpu_custom_call.1} parent=1 // loop_header
      %s17 = sphi 0, %s21
      %p18 = scmp.ge.s32.totalorder %s17, 4
      %s27 = sphi 0, %s29
      %s30 = sphi 0, %s27
      %s31 = sphi 0, %s30
      %s47 = sphi 0, %s31
      %s51 = sphi 0, %s51
      %s53 = sphi 0, %s51
      %s54 = sphi 0, %s53
      %s68 = sphi 0, %s54
      %s72 = sphi 0, %s72
      %s74 = sphi 0, %s72
      %s75 = sphi 0, %s74
      %s89 = sphi 0, %s75
      %s93 = sphi 0, %s93
      %s95 = sphi 0, %s93
      %s96 = sphi 0, %s95
      %s110 = sphi 0, %s96
      %s116 = sphi 0, %s118
      %s119 = sphi 0, %s116
      %s120 = sphi 0, %s119
      %s136 = sphi 0, %s120
    $region4: #{tpu_custom_call.1} parent=1 // loop_header_branch
      %20 = sbr.rel (%p18) target = $region8
    $region5: #{tpu_custom_call.1} parent=1 // loop_body
      %s22 = ssub.s32 %s17, 1
      %s23 = ssub.s32 %s17, 2
      %s24 = sadd.s32 %s17, 1
      %s25 = ssub.s32 %s17, %s24
      %p26 = scmp.eq.s32.totalorder %s25, 0
      %s28 = sadd.s32 %s27, 1
      %s29 = scalar_select %p26, %s27, %s28
      %p32 = pneg %p26
      %p33 = scmp.eq.s32.totalorder %s17, 1
      %p34 = por %p32, %p33
      %p35 = scmp.ne.s32.totalorder %s27, %s30
      %p36 = scmp.eq.s32.totalorder %s17, 0
      %p37 = por %p35, %p36
      %p38 = scmp.ne.s32.totalorder %s27, %s30
      %p39 = scmp.eq.s32.totalorder %s22, 1
      %p40 = por %p38, %p39
      %p41 = scmp.ne.s32.totalorder %s30, %s31
      %p42 = scmp.eq.s32.totalorder %s22, 0
      %p43 = por %p41, %p42
      %p44 = scmp.ne.s32.totalorder %s30, %s31
      %p45 = scmp.eq.s32.totalorder %s23, 1
      %p46 = por %p44, %p45
      %p48 = scmp.ne.s32.totalorder %s31, %s47
      %p49 = scmp.eq.s32.totalorder %s23, 0
      %p50 = por %p48, %p49
      %s52 = sadd.s32 %s51, 1
      %p55 = scmp.eq.s32.totalorder %s17, 1
      %p56 = scmp.ne.s32.totalorder %s51, %s53
      %p57 = scmp.eq.s32.totalorder %s17, 0
      %p58 = por %p56, %p57
      %p59 = scmp.ne.s32.totalorder %s51, %s53
      %p60 = scmp.eq.s32.totalorder %s22, 1
      %p61 = por %p59, %p60
      %p62 = scmp.ne.s32.totalorder %s53, %s54
      %p63 = scmp.eq.s32.totalorder %s22, 0
      %p64 = por %p62, %p63
      %p65 = scmp.ne.s32.totalorder %s53, %s54
      %p66 = scmp.eq.s32.totalorder %s23, 1
      %p67 = por %p65, %p66
      %p69 = scmp.ne.s32.totalorder %s54, %s68
      %p70 = scmp.eq.s32.totalorder %s23, 0
      %p71 = por %p69, %p70
      %s73 = sadd.s32 %s72, 1
      %p76 = scmp.eq.s32.totalorder %s17, 1
      %p77 = scmp.ne.s32.totalorder %s72, %s74
      %p78 = scmp.eq.s32.totalorder %s17, 0
      %p79 = por %p77, %p78
      %p80 = scmp.ne.s32.totalorder %s72, %s74
      %p81 = scmp.eq.s32.totalorder %s22, 1
      %p82 = por %p80, %p81
      %p83 = scmp.ne.s32.totalorder %s74, %s75
      %p84 = scmp.eq.s32.totalorder %s22, 0
      %p85 = por %p83, %p84
      %p86 = scmp.ne.s32.totalorder %s74, %s75
      %p87 = scmp.eq.s32.totalorder %s23, 1
      %p88 = por %p86, %p87
      %p90 = scmp.ne.s32.totalorder %s75, %s89
      %p91 = scmp.eq.s32.totalorder %s23, 0
      %p92 = por %p90, %p91
      %s94 = sadd.s32 %s93, 1
      %p97 = scmp.eq.s32.totalorder %s17, 1
      %p98 = scmp.ne.s32.totalorder %s93, %s95
      %p99 = scmp.eq.s32.totalorder %s17, 0
      %p100 = por %p98, %p99
      %p101 = scmp.ne.s32.totalorder %s93, %s95
      %p102 = scmp.eq.s32.totalorder %s22, 1
      %p103 = por %p101, %p102
      %p104 = scmp.ne.s32.totalorder %s95, %s96
      %p105 = scmp.eq.s32.totalorder %s22, 0
      %p106 = por %p104, %p105
      %p107 = scmp.ne.s32.totalorder %s95, %s96
      %p108 = scmp.eq.s32.totalorder %s23, 1
      %p109 = por %p107, %p108
      %p111 = scmp.ne.s32.totalorder %s96, %s110
      %p112 = scmp.eq.s32.totalorder %s23, 0
      %p113 = por %p111, %p112
      %s114 = ssub.s32 %s17, %s24
      %p115 = scmp.eq.s32.totalorder %s114, 0
      %s117 = sadd.s32 %s116, 1
      %s118 = scalar_select %p115, %s116, %s117
      %p121 = pneg %p115
      %p122 = scmp.eq.s32.totalorder %s17, 1
      %p123 = por %p121, %p122
      %p124 = scmp.ne.s32.totalorder %s116, %s119
      %p125 = scmp.eq.s32.totalorder %s17, 0
      %p126 = por %p124, %p125
      %p127 = scmp.ne.s32.totalorder %s116, %s119
      %p128 = scmp.eq.s32.totalorder %s22, 1
      %p129 = por %p127, %p128
      %p130 = scmp.ne.s32.totalorder %s119, %s120
      %p131 = scmp.eq.s32.totalorder %s22, 0
      %p132 = por %p130, %p131
      %p133 = scmp.ne.s32.totalorder %s119, %s120
      %p134 = scmp.eq.s32.totalorder %s23, 1
      %p135 = por %p133, %p134
      %p137 = scmp.ne.s32.totalorder %s120, %s136
      %p138 = scmp.eq.s32.totalorder %s23, 0
      %p139 = por %p137, %p138
      %p140 = scmp.le.s32.totalorder 1, %s17
      %p141 = scmp.lt.s32.totalorder %s17, 3
      %p142 = pnand %p140, %p141
      %p143 = pneg %p142
      // Predicated region
      $region9: #{tpu_custom_call.1} parent=5 // pred_check
        _
      $region10: #{tpu_custom_call.1} parent=5 // pred_check_branch
        %145 = sbr.rel (%p142) target = $region12
      $region11: #{tpu_custom_call.1} parent=5 // pred_region
        %s146 = ssub.s32 %s17, 1
        // Predicated region
        $region13: #{tpu_custom_call.1} parent=11 // pred_check
          %p147 = pneg %p64
        $region14: #{tpu_custom_call.1} parent=11 // pred_check_branch
          %149 = sbr.rel (%p147) target = $region16
        $region15: #{tpu_custom_call.1} parent=11 // pred_region
          _
        $region16: #{tpu_custom_call.1} parent=11 // pred_fallthru
          _
        // Predicated region
        $region17: #{tpu_custom_call.1} parent=11 // pred_check
          %p150 = pneg %p85
        $region18: #{tpu_custom_call.1} parent=11 // pred_check_branch
          %152 = sbr.rel (%p150) target = $region20
        $region19: #{tpu_custom_call.1} parent=11 // pred_region
          %s154 = ssub.s32 256, 256
          %155 = vsyncadd [#allocation6], %s154
          %s156 = sshll.u32 [#allocation5], 4
          %s157 = int_to_ptr.vmem [resolvable:$true] %s156
          %162 = dma.hbm_to_vmem [thread:$0]  %s2, 256, %s157, [#allocation6], 128, 128, 8
        $region20: #{tpu_custom_call.1} parent=11 // pred_fallthru
          _
        // Predicated region
        $region21: #{tpu_custom_call.1} parent=11 // pred_check
          %p163 = pneg %p106
        $region22: #{tpu_custom_call.1} parent=11 // pred_check_branch
          %165 = sbr.rel (%p163) target = $region24
        $region23: #{tpu_custom_call.1} parent=11 // pred_region
          _
        $region24: #{tpu_custom_call.1} parent=11 // pred_fallthru
          _
      $region12: #{tpu_custom_call.1} parent=5 // pred_fallthru
        _
      %p166 = scmp.lt.s32.totalorder %s17, 2
      // Predicated region
      $region25: #{tpu_custom_call.1} parent=5 // pred_check
        %p167 = pneg %p166
      $region26: #{tpu_custom_call.1} parent=5 // pred_check_branch
        %169 = sbr.rel (%p167) target = $region28
      $region27: #{tpu_custom_call.1} parent=5 // pred_region
        // Predicated region
        $region29: #{tpu_custom_call.1} parent=27 // pred_check
          %p170 = pneg %p37
        $region30: #{tpu_custom_call.1} parent=27 // pred_check_branch
          %172 = sbr.rel (%p170) target = $region32
        $region31: #{tpu_custom_call.1} parent=27 // pred_region
          %s173 = sand.u32 %s27, 1
          %s174 = scalar_lea.sflag [#allocation3], %s173
          %s175 = sand.u32 %s27, 1
          %s176 = smul.addr %s175, 64
          %s177 = scalar_lea.vmem [#allocation2], %s176
          %s179 = ssub.s32 1024, 1024
          %180 = vsyncadd %s174, %s179
          %s181 = smul.addr %s17, 8
          %s182 = smul.addr %s181, 128
          %s183 = scalar_lea.hbm %s0, %s182
          %s184 = sshll.u32 %s177, 4
          %s185 = int_to_ptr.vmem [resolvable:$true] %s184
          %190 = dma.hbm_to_vmem [thread:$0]  %s183, 1024, %s185, %s174, 256, 256, 16
        $region32: #{tpu_custom_call.1} parent=27 // pred_fallthru
          _
      $region28: #{tpu_custom_call.1} parent=5 // pred_fallthru
        _
      %p191 = scmp.le.s32.totalorder 1, %s17
      %p192 = scmp.lt.s32.totalorder %s17, 3
      %p193 = pnand %p191, %p192
      %p194 = pneg %p193
      // Predicated region
      $region33: #{tpu_custom_call.1} parent=5 // pred_check
        _
      $region34: #{tpu_custom_call.1} parent=5 // pred_check_branch
        %196 = sbr.rel (%p193) target = $region36
      $region35: #{tpu_custom_call.1} parent=5 // pred_region
        %s197 = ssub.s32 %s17, 1
        %s198 = sand.u32 %s30, 1
        %s199 = scalar_lea.sflag [#allocation3], %s198
        %s200 = sand.u32 %s30, 1
        %s201 = smul.addr %s200, 64
        %s202 = scalar_lea.vmem [#allocation2], %s201
        // Predicated region
        $region37: #{tpu_custom_call.1} parent=35 // pred_check
          %p203 = pneg %p43
        $region38: #{tpu_custom_call.1} parent=35 // pred_check_branch
          %205 = sbr.rel (%p203) target = $region40
        $region39: #{tpu_custom_call.1} parent=35 // pred_region
          %206 = dma.done %s199, 1024
        $region40: #{tpu_custom_call.1} parent=35 // pred_fallthru
          _
        // Predicated region
        $region41: #{tpu_custom_call.1} parent=35 // pred_check
          %p207 = pneg %p85
        $region42: #{tpu_custom_call.1} parent=35 // pred_check_branch
          %209 = sbr.rel (%p207) target = $region44
        $region43: #{tpu_custom_call.1} parent=35 // pred_region
          %210 = dma.done [#allocation6], 256
        $region44: #{tpu_custom_call.1} parent=35 // pred_fallthru
          _
        %s211 = sand.u32 %s30, 1
        %s212 = scalar_lea.sflag [#allocation3], %s211
        %s213 = sand.u32 %s30, 1
        %s214 = smul.addr %s213, 64
        %s215 = scalar_lea.vmem [#allocation2], %s214
        %p216 = pneg %p43
        %p217 = pneg %p40
        %p218 = pneg %p64
        %p219 = pneg %p61
        %p220 = pneg %p85
        %p221 = pneg %p82
        %p222 = pneg %p106
        %p223 = pneg %p103
        %p224 = pneg %p132
        %p225 = pneg %p129
        %s226 = sand.u32 %s119, 1
        %s227 = scalar_lea.sflag [#allocation4], %s226
        %s228 = sand.u32 %s119, 1
        %s229 = smul.addr %s228, 16
        %s230 = scalar_lea.vmem [#allocation7], %s229
        %v231 = vld [vmem:[%s1] sm:$0xff]
        %v232 = vld [vmem:[%s1 + $0x8] sm:$0xff]
        %v233 = vld [vmem:[#allocation5] sm:$0xff]
        %v234 = vld [vmem:[#allocation5 + $0x8] sm:$0xff]
        %v235 = vld [vmem:[%s3] sm:$0xff]
        %v236 = vld [vmem:[%s3 + $0x8] sm:$0xff]
        %v237 = vld [vmem:[%s202] sm:$0xff]
        %v238 = vld [vmem:[%s202 + $0x8] sm:$0xff]
        %v239 = vld [vmem:[%s202 + $0x10] sm:$0xff]
        %v240 = vld [vmem:[%s202 + $0x18] sm:$0xff]
        %v241 = vld [vmem:[%s202 + $0x20] sm:$0xff]
        %v242 = vld [vmem:[%s202 + $0x28] sm:$0xff]
        %v243 = vld [vmem:[%s202 + $0x30] sm:$0xff]
        %v244 = vld [vmem:[%s202 + $0x38] sm:$0xff]
        %vm245 = vcmask 261120
        %v247 = vsel %vm245, %v233, 0
        %v250 = vsel %vm245, %v234, 0
        %252 = vmatprep.subr.mxu0 %v238
        %253 = vmatpush1.msra.mxu0 %v237
        %254 = vmatprep.subr.mxu0 %v240
        %255 = vmatpush1.msra.mxu0 %v239
        %256 = vmatprep.subr.mxu0 %v242
        %257 = vmatpush1.msra.mxu0 %v241
        %258 = vmatprep.subr.mxu0 %v244
        %259 = vmatpush1.msra.mxu0 %v243
        %260 = vmatprep.subr.mxu0 0.0
        %261 = vmatpush1.msra.mxu0 0.0
        %262 = vmatprep.subr.mxu0 0.0
        %263 = vmatpush1.msra.mxu0 0.0
        %264 = vmatprep.subr.mxu0 0.0
        %265 = vmatpush1.msra.mxu0 0.0
        %266 = vmatprep.subr.mxu0 0.0
        %267 = vmatpush1.msra.mxu0 0.0
        %268 = vmatprep.subr.mxu0 0.0
        %269 = vmatpush1.msra.mxu0 0.0
        %270 = vmatprep.subr.mxu0 0.0
        %271 = vmatpush1.msra.mxu0 0.0
        %272 = vmatprep.subr.mxu0 0.0
        %273 = vmatpush1.msra.mxu0 0.0
        %274 = vmatprep.subr.mxu0 0.0
        %275 = vmatpush1.msra.mxu0 0.0
        %276 = vmatprep.subr.mxu0 0.0
        %277 = vmatpush1.msra.mxu0 0.0
        %278 = vmatprep.subr.mxu0 0.0
        %279 = vmatpush1.msra.mxu0 0.0
        %280 = vmatprep.subr.mxu0 0.0
        %281 = vmatpush1.msra.mxu0 0.0
        %282 = vmatprep.subr.mxu0 0.0
        %283 = vmatpush1.msra.mxu0 0.0
        %284 = vmatprep.subr.mxu0 0.0
        %285 = vmatpush1.msra.mxu0 0.0
        %286 = vmatprep.subr.mxu0 0.0
        %287 = vmatpush1.msra.mxu0 0.0
        %288 = vmatprep.subr.mxu0 0.0
        %289 = vmatpush1.msra.mxu0 0.0
        %290 = vmatprep.subr.mxu0 0.0
        %291 = vmatpush1.msra.mxu0 0.0
        %292 = vmatprep.subr.mxu0 0.0
        %293 = vmatpush1.msra.mxu0 0.0
        %294 = vmatprep.subr.mxu0 0.0
        %295 = vmatpush1.msra.mxu0 0.0
        %296 = vmatprep.subr.mxu0 0.0
        %297 = vmatpush1.msra.mxu0 0.0
        %298 = vmatprep.subr.mxu0 0.0
        %299 = vmatpush1.msra.mxu0 0.0
        %300 = vmatprep.subr.mxu0 0.0
        %301 = vmatpush1.msra.mxu0 0.0
        %302 = vmatprep.subr.mxu0 0.0
        %303 = vmatpush1.msra.mxu0 0.0
        %304 = vmatprep.subr.mxu0 0.0
        %305 = vmatpush1.msra.mxu0 0.0
        %306 = vmatprep.subr.mxu0 0.0
        %307 = vmatpush1.msra.mxu0 0.0
        %308 = vmatprep.subr.mxu0 0.0
        %309 = vmatpush1.msra.mxu0 0.0
        %310 = vmatprep.subr.mxu0 0.0
        %311 = vmatpush1.msra.mxu0 0.0
        %312 = vmatprep.subr.mxu0 0.0
        %313 = vmatpush1.msra.mxu0 0.0
        %314 = vmatprep.subr.mxu0 0.0
        %315 = vmatpush1.msra.mxu0 0.0
        %316 = vmatprep.mubr.f32.mxu0 0.0
        %317 = vmatmul.mubr.f32.gmra.mrb[0].mxu0 %v247
        %v318 = vpop.f32.mrb[0].mxu0
        %v319 = vadd.f32 0.0, %v318
        %v320 = vpop.f32.mrb[0].mxu0
        %v321 = vadd.f32 0.0, %v320
        %322 = vmatprep.mubr.f32.mxu0 0.0
        %323 = vmatmul.mubr.f32.gmra.mrb[0].mxu0 %v250
        %v324 = vpop.f32.mrb[0].mxu0
        %v325 = vadd.f32 0.0, %v324
        %v326 = vpop.f32.mrb[0].mxu0
        %v327 = vadd.f32 0.0, %v326
        %328 = vdwg.mxu0
        %v329 = vmul.f32 %v237, %v237
        %v330 = vmul.f32 %v238, %v238
        %v331 = vmul.f32 %v239, %v239
        %v332 = vmul.f32 %v240, %v240
        %v333 = vmul.f32 %v241, %v241
        %v334 = vmul.f32 %v242, %v242
        %v335 = vmul.f32 %v243, %v243
        %v336 = vmul.f32 %v244, %v244
        %v337 = vadd.f32 %v329, %v331
        %v338 = vadd.f32 %v337, %v333
        %v339 = vadd.f32 %v338, %v335
        %v340 = vrot.slane %v339, 4
        %v341 = vadd.f32 %v339, %v340
        %v342 = vrot.slane %v341, 2
        %v343 = vadd.f32 %v341, %v342
        %v344 = vrot.slane %v343, 1
        %v345 = vadd.f32 %v343, %v344
        %v346 = vadd.f32 %v330, %v332
        %v347 = vadd.f32 %v346, %v334
        %v348 = vadd.f32 %v347, %v336
        %v349 = vrot.slane %v348, 4
        %v350 = vadd.f32 %v348, %v349
        %v351 = vrot.slane %v350, 2
        %v352 = vadd.f32 %v350, %v351
        %v353 = vrot.slane %v352, 1
        %v354 = vadd.f32 %v352, %v353
        %356 = vset.pattern.permute.xlu0 0
        %357 = vperm.xlu0 %356, %v235
        %v358 = vpop.permute.xlu0 %357
        %361 = vset.pattern.permute.xlu0 0
        %362 = vperm.xlu0 %361, %v236
        %v363 = vpop.permute.xlu0 %362
        %v365 = vmul.f32 %v358, %v345
        %v366 = vmul.f32 %v358, %v354
        %v367 = vmul.f32 %v363, %v345
        %v368 = vmul.f32 %v363, %v354
        %v369 = vadd.f32 %v365, %v319
        %v370 = vadd.f32 %v366, %v321
        %v371 = vadd.f32 %v367, %v325
        %v372 = vadd.f32 %v368, %v327
        %v373 = vmax.f32 %v369, %v370
        %374 = vmax.xlane.f32.xlu0 %v373
        %v375 = vpop.xlane.xlu0 %374
        %v376 = vmax.f32 %v371, %v372
        %377 = vmax.xlane.f32.xlu0 %v376
        %v378 = vpop.xlane.xlu0 %377
        %v379 = vsub.f32 %v369, %v375
        %v380 = vsub.f32 %v370, %v375
        %v381 = vsub.f32 %v371, %v378
        %v382 = vsub.f32 %v372, %v378
        %v383 = vmul.f32 %v379, 1.442695
        %v384 = vpow.pop %v383
        %v385 = vmul.f32 %v380, 1.442695
        %v386 = vpow.pop %v385
        %v387 = vmul.f32 %v381, 1.442695
        %v388 = vpow.pop %v387
        %v389 = vmul.f32 %v382, 1.442695
        %v390 = vpow.pop %v389
        %v391 = vadd.f32 %v384, %v386
        %392 = vadd.xlane.f32.xlu0 %v391
        %v393 = vpop.xlane.xlu0 %392
        %v394 = vadd.f32 %v388, %v390
        %395 = vadd.xlane.f32.xlu0 %v394
        %v396 = vpop.xlane.xlu0 %395
        %397 = vmatprep.subr.mxu0 %v238
        %398 = vmatpush1.xpose.msra.mxu0 %v237
        %399 = vmatprep.subr.mxu0 %v240
        %400 = vmatpush1.xpose.msra.mxu0 %v239
        %401 = vmatprep.subr.mxu0 %v242
        %402 = vmatpush1.xpose.msra.mxu0 %v241
        %403 = vmatprep.subr.mxu0 %v244
        %404 = vmatpush1.xpose.msra.mxu0 %v243
        %405 = vmatprep.subr.mxu0 0.0
        %406 = vmatpush1.xpose.msra.mxu0 0.0
        %407 = vmatprep.subr.mxu0 0.0
        %408 = vmatpush1.xpose.msra.mxu0 0.0
        %409 = vmatprep.subr.mxu0 0.0
        %410 = vmatpush1.xpose.msra.mxu0 0.0
        %411 = vmatprep.subr.mxu0 0.0
        %412 = vmatpush1.xpose.msra.mxu0 0.0
        %413 = vmatprep.subr.mxu0 0.0
        %414 = vmatpush1.xpose.msra.mxu0 0.0
        %415 = vmatprep.subr.mxu0 0.0
        %416 = vmatpush1.xpose.msra.mxu0 0.0
        %417 = vmatprep.subr.mxu0 0.0
        %418 = vmatpush1.xpose.msra.mxu0 0.0
        %419 = vmatprep.subr.mxu0 0.0
        %420 = vmatpush1.xpose.msra.mxu0 0.0
        %421 = vmatprep.subr.mxu0 0.0
        %422 = vmatpush1.xpose.msra.mxu0 0.0
        %423 = vmatprep.subr.mxu0 0.0
        %424 = vmatpush1.xpose.msra.mxu0 0.0
        %425 = vmatprep.subr.mxu0 0.0
        %426 = vmatpush1.xpose.msra.mxu0 0.0
        %427 = vmatprep.subr.mxu0 0.0
        %428 = vmatpush1.xpose.msra.mxu0 0.0
        %429 = vmatprep.subr.mxu0 0.0
        %430 = vmatpush1.xpose.msra.mxu0 0.0
        %431 = vmatprep.subr.mxu0 0.0
        %432 = vmatpush1.xpose.msra.mxu0 0.0
        %433 = vmatprep.subr.mxu0 0.0
        %434 = vmatpush1.xpose.msra.mxu0 0.0
        %435 = vmatprep.subr.mxu0 0.0
        %436 = vmatpush1.xpose.msra.mxu0 0.0
        %437 = vmatprep.subr.mxu0 0.0
        %438 = vmatpush1.xpose.msra.mxu0 0.0
        %439 = vmatprep.subr.mxu0 0.0
        %440 = vmatpush1.xpose.msra.mxu0 0.0
        %441 = vmatprep.subr.mxu0 0.0
        %442 = vmatpush1.xpose.msra.mxu0 0.0
        %443 = vmatprep.subr.mxu0 0.0
        %444 = vmatpush1.xpose.msra.mxu0 0.0
        %445 = vmatprep.subr.mxu0 0.0
        %446 = vmatpush1.xpose.msra.mxu0 0.0
        %447 = vmatprep.subr.mxu0 0.0
        %448 = vmatpush1.xpose.msra.mxu0 0.0
        %449 = vmatprep.subr.mxu0 0.0
        %450 = vmatpush1.xpose.msra.mxu0 0.0
        %451 = vmatprep.subr.mxu0 0.0
        %452 = vmatpush1.xpose.msra.mxu0 0.0
        %453 = vmatprep.subr.mxu0 0.0
        %454 = vmatpush1.xpose.msra.mxu0 0.0
        %455 = vmatprep.subr.mxu0 0.0
        %456 = vmatpush1.xpose.msra.mxu0 0.0
        %457 = vmatprep.subr.mxu0 0.0
        %458 = vmatpush1.xpose.msra.mxu0 0.0
        %459 = vmatprep.subr.mxu0 0.0
        %460 = vmatpush1.xpose.msra.mxu0 0.0
        %461 = vmatprep.mubr.f32.mxu0 %v386
        %462 = vmatmul.mubr.f32.gmra.mrb[0].mxu0 %v384
        %v463 = vpop.f32.mrb[0].mxu0
        %v464 = vadd.f32 0.0, %v463
        %v465 = vpop.f32.mrb[0].mxu0
        %466 = vmatprep.mubr.f32.mxu0 %v390
        %467 = vmatmul.mubr.f32.gmra.mrb[0].mxu0 %v388
        %v468 = vpop.f32.mrb[0].mxu0
        %v469 = vadd.f32 0.0, %v468
        %v470 = vpop.f32.mrb[0].mxu0
        %471 = vdwg.mxu0
        %v472 = vrcp.pop %v393
        %v473 = vrcp.pop %v396
        %v474 = vmul.f32 %v464, %v472
        %v475 = vmul.f32 %v469, %v473
        %v476 = vsub.f32 %v474, %v231
        %v477 = vsub.f32 %v475, %v232
        %478 = vst.msk [vmem:[%s230] sm:$0xff] %vm245, %v476
        %479 = vst.msk [vmem:[%s230 + $0x8] sm:$0xff] %vm245, %v477
        %s480 = sand.u32 %s119, 1
        %s481 = scalar_lea.sflag [#allocation4], %s480
        %s482 = sand.u32 %s119, 1
        %s483 = smul.addr %s482, 16
        %s484 = scalar_lea.vmem [#allocation7], %s483
        // Predicated region
        $region45: #{tpu_custom_call.1} parent=35 // pred_check
          %p485 = pneg %p129
        $region46: #{tpu_custom_call.1} parent=35 // pred_check_branch
          %487 = sbr.rel (%p485) target = $region48
        $region47: #{tpu_custom_call.1} parent=35 // pred_region
          %s489 = ssub.s32 256, 256
          %490 = vsyncadd %s481, %s489
          %s491 = smul.addr %s22, 2
          %s492 = smul.addr %s491, 128
          %s493 = scalar_lea.hbm %s4, %s492
          %s494 = sshll.u32 %s484, 4
          %s495 = int_to_ptr.vmem [resolvable:$true] %s494
          %500 = dma.vmem_to_hbm [thread:$0]  %s495, 256, %s493, %s481, 128, 128, 8
        $region48: #{tpu_custom_call.1} parent=35 // pred_fallthru
          _
      $region36: #{tpu_custom_call.1} parent=5 // pred_fallthru
        _
      %p501 = scmp.le.s32.totalorder 2, %s17
      // Predicated region
      $region49: #{tpu_custom_call.1} parent=5 // pred_check
        %p502 = pneg %p501
      $region50: #{tpu_custom_call.1} parent=5 // pred_check_branch
        %504 = sbr.rel (%p502) target = $region52
      $region51: #{tpu_custom_call.1} parent=5 // pred_region
        %s505 = ssub.s32 %s17, 2
        // Predicated region
        $region53: #{tpu_custom_call.1} parent=51 // pred_check
          %p506 = pneg %p135
        $region54: #{tpu_custom_call.1} parent=51 // pred_check_branch
          %508 = sbr.rel (%p506) target = $region56
        $region55: #{tpu_custom_call.1} parent=51 // pred_region
          %s509 = sand.u32 %s120, 1
          %s510 = scalar_lea.sflag [#allocation4], %s509
          %s511 = sand.u32 %s120, 1
          %s512 = smul.addr %s511, 16
          %s513 = scalar_lea.vmem [#allocation7], %s512
          %514 = dma.done %s510, 256
        $region56: #{tpu_custom_call.1} parent=51 // pred_fallthru
          _
      $region52: #{tpu_custom_call.1} parent=5 // pred_fallthru
        _
    $region6: #{tpu_custom_call.1} parent=1 // loop_footer
      %s21 = sadd.s32 1, %s17
    $region7: #{tpu_custom_call.1} parent=1 // loop_footer_branch
      %16 = sbr.rel target = $region3
    $region8: #{tpu_custom_call.1} parent=1 // loop_exit
      _
    %515 = vsyncpa [#allocation3], 1
    %s516 = scalar_lea.sflag [#allocation3], 1
    %517 = vsyncpa %s516, 1
    %518 = vsyncpa [#allocation6], 1
    %519 = vsyncpa [#allocation4], 1
    %s520 = scalar_lea.sflag [#allocation4], 1
    %521 = vsyncpa %s520, 1

</llo_original>
